<compile_context>
chip_gen: v5e
topology: v5e:2x2
jax: 0.10.0
libtpu: 0.0.40
codegen_flags: <defaults>
</compile_context>

<pallas_src>
import functools

import jax
import jax.numpy as jnp
import numpy as np
from jax.experimental import pallas as pl
from jax.experimental.pallas import tpu as pltpu


H1, H2 = 400, 300            # true hidden sizes from the torch module
H1_PAD, H2_PAD = 512, 384    # padded to multiples of 128 (lane-dense)
SUBLANE = 8                  # f32 sublane granule
MAX_TB = 512                 # max batch-tile rows (VMEM footprint stays tiny)


def _round_up(n, m):
    return ((n + m - 1) // m) * m


def _device_kind():
    try:
        return jax.devices()[0].device_kind.lower()
    except Exception:  # pragma: no cover - defensive
        return ""


def _is_two_tensorcore_chip():
    # v7x has 2 TensorCores per chip; older generations used here have 1.
    return "v7" in _device_kind()


def _has_bf16_valu():
    # v5e (and older) have no bf16 VALU/EUP -> keep f32 epilogues there.
    kind = _device_kind()
    return not any(v in kind for v in ("v2", "v3", "v4", "v5"))


def actor_kernel(x_ref, w1_ref, b1_ref, w2_ref, b2_ref, w3_ref, b3_ref, o_ref,
                 *, act_dtype):
    # Layer 1: Linear(state -> 512pad) + ReLU. bf16 MXU inputs, f32 accumulate.
    x = x_ref[...].astype(jnp.bfloat16)
    h1 = jnp.dot(x, w1_ref[...], preferred_element_type=jnp.float32)
    # Bias add in f32, then downcast (no-op on v5e) before ReLU; ReLU commutes
    # with the downcast so numerics match the cast-after-relu reference.
    h1 = jnp.maximum((h1 + b1_ref[...]).astype(act_dtype), 0)

    # Layer 2: Linear(512pad -> 384pad) + ReLU.
    h2 = jnp.dot(h1.astype(jnp.bfloat16), w2_ref[...],
                 preferred_element_type=jnp.float32)
    h2 = jnp.maximum((h2 + b2_ref[...]).astype(act_dtype), 0)

    # Layer 3: Linear(384pad -> 128pad) + tanh (tanh on EUP, f32).
    o = jnp.dot(h2.astype(jnp.bfloat16), w3_ref[...],
                preferred_element_type=jnp.float32)
    o_ref[...] = jnp.tanh(o + b3_ref[...])


def _choose_tiling(batch):
    """Pick (padded_batch, batch_tile) per the perf feedback."""
    b_pad = _round_up(max(batch, SUBLANE), SUBLANE)
    if b_pad <= MAX_TB:
        tb = b_pad                       # one block covers the whole batch
    else:
        tb = MAX_TB
        b_pad = _round_up(b_pad, tb)
    # v7x: guarantee >=2 grid steps so both TensorCores get work, when the
    # batch can be split into two sublane-aligned halves.
    if (_is_two_tensorcore_chip() and b_pad // tb < 2
            and b_pad >= 2 * SUBLANE and b_pad % (2 * SUBLANE) == 0):
        tb = b_pad // 2
    return b_pad, tb


def actor_forward(x, packed, action_dim, *, act_dtype=None):
    """Fused forward pass.

    x:      [B, state_dim] f32
    packed: dict of lane-padded params (bf16 weights [in,out], f32 biases [1,out])
    returns [B, action_dim] f32 in (-1, 1)
    """
    B, S = x.shape
    a_pad = packed["w3"].shape[1]
    if act_dtype is None:
        act_dtype = jnp.bfloat16 if _has_bf16_valu() else jnp.float32

    b_pad, tb = _choose_tiling(B)
    if b_pad != B:
        x = jnp.pad(x, ((0, b_pad - B), (0, 0)))

    const = lambda i: (0, 0)   # weights/biases: one block, resident across grid
    kernel = functools.partial(actor_kernel, act_dtype=act_dtype)

    out = pl.pallas_call(
        kernel,
        out_shape=jax.ShapeDtypeStruct((b_pad, a_pad), jnp.float32),
        grid=(b_pad // tb,),
        in_specs=[
            pl.BlockSpec((tb, S), lambda i: (i, 0)),          # x batch tile
            pl.BlockSpec(packed["w1"].shape, const),
            pl.BlockSpec(packed["b1"].shape, const),
            pl.BlockSpec(packed["w2"].shape, const),
            pl.BlockSpec(packed["b2"].shape, const),
            pl.BlockSpec(packed["w3"].shape, const),
            pl.BlockSpec(packed["b3"].shape, const),
        ],
        out_specs=pl.BlockSpec((tb, a_pad), lambda i: (i, 0)),  # lane-dense
        compiler_params=pltpu.CompilerParams(
            dimension_semantics=("parallel",)),
    )(x, packed["w1"], packed["b1"], packed["w2"], packed["b2"],
      packed["w3"], packed["b3"])

    return out[:B, :action_dim]


def init_actor_params(key, state_dim, action_dim):
    """fp32 params mimicking nn.Linear U(-1/sqrt(fan_in), 1/sqrt(fan_in)).

    Weights stored transposed relative to torch ([in, out]) so y = x @ W + b.
    """
    dims = [(state_dim, H1), (H1, H2), (H2, action_dim)]
    params = {}
    for i, (fan_in, fan_out) in enumerate(dims, start=1):
        key, kw, kb = jax.random.split(key, 3)
        bound = 1.0 / np.sqrt(fan_in)
        params[f"w{i}"] = jax.random.uniform(
            kw, (fan_in, fan_out), jnp.float32, minval=-bound, maxval=bound)
        params[f"b{i}"] = jax.random.uniform(
            kb, (1, fan_out), jnp.float32, minval=-bound, maxval=bound)
    return params


def pack_actor_params(params, state_dim, action_dim):
    """Zero-pad lane dims to multiples of 128; cast weights to bf16.

    Zero padding keeps padded lanes exactly 0 through relu/tanh, so slicing
    the kernel output reproduces the unpadded network exactly.
    """
    a_pad = _round_up(max(action_dim, 128), 128)
    targets = {
        "w1": (state_dim, H1_PAD), "b1": (1, H1_PAD),
        "w2": (H1_PAD, H2_PAD),    "b2": (1, H2_PAD),
        "w3": (H2_PAD, a_pad),     "b3": (1, a_pad),
    }
    packed = {}
    for name, tgt in targets.items():
        p = params[name]
        p = jnp.pad(p, [(0, tgt[0] - p.shape[0]), (0, tgt[1] - p.shape[1])])
        if name.startswith("w"):
            p = p.astype(jnp.bfloat16)
        packed[name] = p
    return packed


def actor_reference(x, params):
    """Pure-JAX reference replicating the kernel's mixed precision
    (bf16 matmul inputs, f32 accumulation / biases, f32 tanh)."""
    c = lambda a: a.astype(jnp.bfloat16)
    h1 = jax.nn.relu(
        jnp.dot(c(x), c(params["w1"]), preferred_element_type=jnp.float32)
        + params["b1"])
    h2 = jax.nn.relu(
        jnp.dot(c(h1), c(params["w2"]), preferred_element_type=jnp.float32)
        + params["b2"])
    return jnp.tanh(
        jnp.dot(c(h2), c(params["w3"]), preferred_element_type=jnp.float32)
        + params["b3"])


if __name__ == "__main__":
    # Small, Actor-consistent shapes: batch=8 states of dim 32, 8-dim actions.
    batch, state_dim, action_dim = 8, 32, 8
    max_action = 1.0  # unused in forward (matches the torch reference)

    key = jax.random.PRNGKey(0)
    key, kx = jax.random.split(key)
    x = jax.random.normal(kx, (batch, state_dim), dtype=jnp.float32)

    params = init_actor_params(key, state_dim, action_dim)
    packed = pack_actor_params(params, state_dim, action_dim)

    out = actor_forward(x, packed, action_dim)
    out = jax.block_until_ready(out)

    ref = actor_reference(x, params)
    assert out.shape == (batch, action_dim)
    np.testing.assert_allclose(np.asarray(out), np.asarray(ref),
                               rtol=1e-2, atol=1e-2)

    print("KERNEL_OK")
</pallas_src>

<mosaic_0001>
module attributes {stable_mosaic.version = 11 : i64} {
  func.func @actor_kernel(%arg0: i32, %arg1: memref<8x32xf32, #tpu.memory_space<vmem>>, %arg2: memref<32x512xbf16, #tpu.memory_space<vmem>>, %arg3: memref<1x512xf32, #tpu.memory_space<vmem>>, %arg4: memref<512x384xbf16, #tpu.memory_space<vmem>>, %arg5: memref<1x384xf32, #tpu.memory_space<vmem>>, %arg6: memref<384x128xbf16, #tpu.memory_space<vmem>>, %arg7: memref<1x128xf32, #tpu.memory_space<vmem>>, %arg8: memref<8x128xf32, #tpu.memory_space<vmem>>) attributes {dimension_semantics = [#tpu.dimension_semantics<parallel>], iteration_bounds = array<i64: 1>, scalar_prefetch = 0 : i64, scratch_operands = 0 : i64, tpu.core_type = #tpu.core_type<tc>, window_params = [{transform_indices = @transform_0, window_bounds = array<i64: 8, 32>}, {pipeline_mode = #tpu.pipeline_mode<synchronous>, transform_indices = @transform_1, window_bounds = array<i64: 32, 512>}, {pipeline_mode = #tpu.pipeline_mode<synchronous>, transform_indices = @transform_2, window_bounds = array<i64: 1, 512>}, {pipeline_mode = #tpu.pipeline_mode<synchronous>, transform_indices = @transform_3, window_bounds = array<i64: 512, 384>}, {pipeline_mode = #tpu.pipeline_mode<synchronous>, transform_indices = @transform_4, window_bounds = array<i64: 1, 384>}, {pipeline_mode = #tpu.pipeline_mode<synchronous>, transform_indices = @transform_5, window_bounds = array<i64: 384, 128>}, {pipeline_mode = #tpu.pipeline_mode<synchronous>, transform_indices = @transform_6, window_bounds = array<i64: 1, 128>}, {transform_indices = @transform_7, window_bounds = array<i64: 8, 128>}]} {
    %c0 = arith.constant 0 : index
    %c0_0 = arith.constant 0 : index
    %0 = vector.load %arg1[%c0, %c0_0] : memref<8x32xf32, #tpu.memory_space<vmem>>, vector<8x32xf32>
    %1 = arith.truncf %0 : vector<8x32xf32> to vector<8x32xbf16>
    %c0_1 = arith.constant 0 : index
    %c0_2 = arith.constant 0 : index
    %2 = vector.load %arg2[%c0_1, %c0_2] : memref<32x512xbf16, #tpu.memory_space<vmem>>, vector<32x512xbf16>
    %cst = arith.constant dense<0.000000e+00> : vector<8x512xf32>
    %3 = tpu.matmul %1, %2, %cst {dimension_numbers = #tpu.dot_dimension_numbers<[1], [0], [0], [1], [0, 0, 1, 1], [], []>} : vector<8x32xbf16>, vector<32x512xbf16>, vector<8x512xf32> -> vector<8x512xf32>
    %c0_3 = arith.constant 0 : index
    %c0_4 = arith.constant 0 : index
    %4 = vector.load %arg3[%c0_3, %c0_4] : memref<1x512xf32, #tpu.memory_space<vmem>>, vector<1x512xf32>
    %5 = vector.broadcast %4 : vector<1x512xf32> to vector<8x512xf32>
    %6 = arith.addf %3, %5 : vector<8x512xf32>
    %7 = arith.truncf %6 : vector<8x512xf32> to vector<8x512xbf16>
    %cst_5 = arith.constant 0.000000e+00 : bf16
    %8 = vector.broadcast %cst_5 : bf16 to vector<8x512xbf16>
    %9 = arith.maximumf %7, %8 : vector<8x512xbf16>
    %c0_6 = arith.constant 0 : index
    %c0_7 = arith.constant 0 : index
    %10 = vector.load %arg4[%c0_6, %c0_7] : memref<512x384xbf16, #tpu.memory_space<vmem>>, vector<512x384xbf16>
    %cst_8 = arith.constant dense<0.000000e+00> : vector<8x384xf32>
    %11 = tpu.matmul %9, %10, %cst_8 {dimension_numbers = #tpu.dot_dimension_numbers<[1], [0], [0], [1], [0, 0, 1, 1], [], []>} : vector<8x512xbf16>, vector<512x384xbf16>, vector<8x384xf32> -> vector<8x384xf32>
    %c0_9 = arith.constant 0 : index
    %c0_10 = arith.constant 0 : index
    %12 = vector.load %arg5[%c0_9, %c0_10] : memref<1x384xf32, #tpu.memory_space<vmem>>, vector<1x384xf32>
    %13 = vector.broadcast %12 : vector<1x384xf32> to vector<8x384xf32>
    %14 = arith.addf %11, %13 : vector<8x384xf32>
    %15 = arith.truncf %14 : vector<8x384xf32> to vector<8x384xbf16>
    %cst_11 = arith.constant 0.000000e+00 : bf16
    %16 = vector.broadcast %cst_11 : bf16 to vector<8x384xbf16>
    %17 = arith.maximumf %15, %16 : vector<8x384xbf16>
    %c0_12 = arith.constant 0 : index
    %c0_13 = arith.constant 0 : index
    %18 = vector.load %arg6[%c0_12, %c0_13] : memref<384x128xbf16, #tpu.memory_space<vmem>>, vector<384x128xbf16>
    %cst_14 = arith.constant dense<0.000000e+00> : vector<8x128xf32>
    %19 = tpu.matmul %17, %18, %cst_14 {dimension_numbers = #tpu.dot_dimension_numbers<[1], [0], [0], [1], [0, 0, 1, 1], [], []>} : vector<8x384xbf16>, vector<384x128xbf16>, vector<8x128xf32> -> vector<8x128xf32>
    %c0_15 = arith.constant 0 : index
    %c0_16 = arith.constant 0 : index
    %20 = vector.load %arg7[%c0_15, %c0_16] : memref<1x128xf32, #tpu.memory_space<vmem>>, vector<1x128xf32>
    %21 = vector.broadcast %20 : vector<1x128xf32> to vector<8x128xf32>
    %22 = arith.addf %19, %21 : vector<8x128xf32>
    %23 = math.tanh %22 : vector<8x128xf32>
    %c0_17 = arith.constant 0 : index
    %c0_18 = arith.constant 0 : index
    %24 = vector.load %arg8[%c0_17, %c0_18] : memref<8x128xf32, #tpu.memory_space<vmem>>, vector<8x128xf32>
    tpu.vector_store %arg8[%c0_17, %c0_18], %23 {strides = array<i32>} : memref<8x128xf32, #tpu.memory_space<vmem>>, vector<8x128xf32>,
    return
  }
  func.func @transform_0(%arg0: i32) -> (i32, i32) {
    %c0_i32 = arith.constant 0 : i32
    %c0_i32_0 = arith.constant 0 : i32
    return %arg0, %c0_i32 : i32, i32
  }
  func.func @transform_1(%arg0: i32) -> (i32, i32) {
    %c0_i32 = arith.constant 0 : i32
    %c0_i32_0 = arith.constant 0 : i32
    %c0_i32_1 = arith.constant 0 : i32
    return %c0_i32, %c0_i32_0 : i32, i32
  }
  func.func @transform_2(%arg0: i32) -> (i32, i32) {
    %c0_i32 = arith.constant 0 : i32
    %c0_i32_0 = arith.constant 0 : i32
    %c0_i32_1 = arith.constant 0 : i32
    return %c0_i32, %c0_i32_0 : i32, i32
  }
  func.func @transform_3(%arg0: i32) -> (i32, i32) {
    %c0_i32 = arith.constant 0 : i32
    %c0_i32_0 = arith.constant 0 : i32
    %c0_i32_1 = arith.constant 0 : i32
    return %c0_i32, %c0_i32_0 : i32, i32
  }
  func.func @transform_4(%arg0: i32) -> (i32, i32) {
    %c0_i32 = arith.constant 0 : i32
    %c0_i32_0 = arith.constant 0 : i32
    %c0_i32_1 = arith.constant 0 : i32
    return %c0_i32, %c0_i32_0 : i32, i32
  }
  func.func @transform_5(%arg0: i32) -> (i32, i32) {
    %c0_i32 = arith.constant 0 : i32
    %c0_i32_0 = arith.constant 0 : i32
    %c0_i32_1 = arith.constant 0 : i32
    return %c0_i32, %c0_i32_0 : i32, i32
  }
  func.func @transform_6(%arg0: i32) -> (i32, i32) {
    %c0_i32 = arith.constant 0 : i32
    %c0_i32_0 = arith.constant 0 : i32
    %c0_i32_1 = arith.constant 0 : i32
    return %c0_i32, %c0_i32_0 : i32, i32
  }
  func.func @transform_7(%arg0: i32) -> (i32, i32) {
    %c0_i32 = arith.constant 0 : i32
    %c0_i32_0 = arith.constant 0 : i32
    return %arg0, %c0_i32 : i32, i32
  }
}

</mosaic_0001>

<llo_original>
// kernel: tpu_custom_call.1
$region0: #{tpu_custom_call.1}
  #allocation0 [shape = 'u32[]', space=smem, size = 0x4, offset = 0x4, fixed_abs, tag = 'smem constant byte address 0x4 - core index']
  #allocation1 [shape = 'u32[72,128]{1,0:T(1,128)}', space=vmem, size = 0x9000, scoped, tag = 'internal scratch']
  %s0 = inlined_call_operand.hbm [shape: f32[8,32], index: 0, kind: input, shape index: {}]
  %s1 = inlined_call_operand.hbm [shape: bf16[32,512], index: 1, kind: input, shape index: {}]
  %s2 = inlined_call_operand.hbm [shape: f32[1,512], index: 2, kind: input, shape index: {}]
  %s3 = inlined_call_operand.hbm [shape: bf16[512,384], index: 3, kind: input, shape index: {}]
  %s4 = inlined_call_operand.vmem [shape: f32[1,384], index: 4, kind: input, shape index: {}]
  %s5 = inlined_call_operand.hbm [shape: bf16[384,128], index: 5, kind: input, shape index: {}]
  %s6 = inlined_call_operand.vmem [shape: f32[1,128], index: 6, kind: input, shape index: {}]
  %s7 = inlined_call_operand.hbm [shape: f32[8,128], index: 7, kind: output, shape index: {}]
  %s8 = sld [smem:[#allocation0]]
  $region58: #{tpu_custom_call.1} parent=0
    _
  %s10 = ssub.s32 1, %s8
  %s11 = scalar_select 0, %s10, %s8
  $region1: #{tpu_custom_call.1} parent=0
    #allocation2 [shape = 'u8[4096]{0}', space=vmem, size = 0x1000, scoped, tag = 'input window, operand 0, single buffered']
    #allocation3 [shape = 's32[1]{0}', space=sflag, size = 0x4, scoped, tag = 'scoped memory for tpu_custom_call.1']
    #allocation4 [shape = 's32[1]{0}', space=sflag, size = 0x4, scoped, tag = 'scoped memory for tpu_custom_call.1']
    #allocation5 [shape = 'u8[32768]{0}', space=vmem, size = 0x8000, scoped, tag = 'input window, operand 1, single buffered']
    #allocation6 [shape = 's32[1]{0}', space=sflag, size = 0x4, scoped, tag = 'scoped memory for tpu_custom_call.1']
    #allocation7 [shape = 'u8[2048]{0}', space=vmem, size = 0x800, scoped, tag = 'input window, operand 2, single buffered']
    #allocation8 [shape = 'u8[393216]{0}', space=vmem, size = 0x60000, scoped, tag = 'input window, operand 3, single buffered']
    #allocation9 [shape = 's32[1]{0}', space=sflag, size = 0x4, scoped, tag = 'scoped memory for tpu_custom_call.1']
    #allocation10 [shape = 'u8[98304]{0}', space=vmem, size = 0x18000, scoped, tag = 'input window, operand 5, single buffered']
    #allocation11 [shape = 'u8[4096]{0}', space=vmem, size = 0x1000, scoped, tag = 'output window, operand 0, single buffered']
    %12 = vsyncpa [#allocation3], 0
    %13 = vsyncpa [#allocation6], 0
    %14 = vsyncpa [#allocation9], 0
    %15 = vsyncpa [#allocation4], 0
    // Predicated region
    $region2: #{tpu_custom_call.1} parent=1 // pred_check
      _
    $region3: #{tpu_custom_call.1} parent=1 // pred_check_branch
      %17 = sbr.rel (0) target = $region5
    $region4: #{tpu_custom_call.1} parent=1 // pred_region
      %19 = vsyncadd [#allocation3], 0
      %s21 = sshll.u32 %s0, 4
      %s22 = int_to_ptr.hbm [resolvable:$true] %s21
      %s23 = sshll.u32 [#allocation2], 4
      %s24 = int_to_ptr.vmem [resolvable:$true] %s23
      %26 = dma.hbm_to_vmem [thread:$0]  %s22, 128, %s24, [#allocation3]
    $region5: #{tpu_custom_call.1} parent=1 // pred_fallthru
      _
    // Predicated region
    $region6: #{tpu_custom_call.1} parent=1 // pred_check
      _
    $region7: #{tpu_custom_call.1} parent=1 // pred_check_branch
      %28 = sbr.rel (0) target = $region9
    $region8: #{tpu_custom_call.1} parent=1 // pred_region
      %30 = vsyncadd [#allocation6], 0
      %s31 = sshll.u32 %s1, 4
      %s32 = int_to_ptr.hbm [resolvable:$true] %s31
      %s33 = sshll.u32 [#allocation5], 4
      %s34 = int_to_ptr.vmem [resolvable:$true] %s33
      %39 = dma.hbm_to_vmem [thread:$0]  %s32, 1024, %s34, [#allocation6], 256, 256, 16
    $region9: #{tpu_custom_call.1} parent=1 // pred_fallthru
      _
    // Predicated region
    $region10: #{tpu_custom_call.1} parent=1 // pred_check
      _
    $region11: #{tpu_custom_call.1} parent=1 // pred_check_branch
      %41 = sbr.rel (0) target = $region13
    $region12: #{tpu_custom_call.1} parent=1 // pred_region
      %43 = vsyncadd [#allocation6], 0
      %s45 = sshll.u32 %s2, 4
      %s46 = int_to_ptr.hbm [resolvable:$true] %s45
      %s47 = sshll.u32 [#allocation7], 4
      %s48 = int_to_ptr.vmem [resolvable:$true] %s47
      %50 = dma.hbm_to_vmem [thread:$0]  %s46, 64, %s48, [#allocation6]
    $region13: #{tpu_custom_call.1} parent=1 // pred_fallthru
      _
    // Predicated region
    $region14: #{tpu_custom_call.1} parent=1 // pred_check
      _
    $region15: #{tpu_custom_call.1} parent=1 // pred_check_branch
      %52 = sbr.rel (0) target = $region17
    $region16: #{tpu_custom_call.1} parent=1 // pred_region
      %54 = vsyncadd [#allocation9], 0
      %s55 = sshll.u32 %s3, 4
      %s56 = int_to_ptr.hbm [resolvable:$true] %s55
      %s57 = sshll.u32 [#allocation8], 4
      %s58 = int_to_ptr.vmem [resolvable:$true] %s57
      %63 = dma.hbm_to_vmem [thread:$0]  %s56, 12288, %s58, [#allocation9], 192, 192, 12
    $region17: #{tpu_custom_call.1} parent=1 // pred_fallthru
      _
    // Predicated region
    $region18: #{tpu_custom_call.1} parent=1 // pred_check
      _
    $region19: #{tpu_custom_call.1} parent=1 // pred_check_branch
      %65 = sbr.rel (0) target = $region21
    $region20: #{tpu_custom_call.1} parent=1 // pred_region
      _
    $region21: #{tpu_custom_call.1} parent=1 // pred_fallthru
      _
    // Predicated region
    $region22: #{tpu_custom_call.1} parent=1 // pred_check
      _
    $region23: #{tpu_custom_call.1} parent=1 // pred_check_branch
      %67 = sbr.rel (0) target = $region25
    $region24: #{tpu_custom_call.1} parent=1 // pred_region
      %69 = vsyncadd [#allocation9], 0
      %s70 = sshll.u32 %s5, 4
      %s71 = int_to_ptr.hbm [resolvable:$true] %s70
      %s72 = sshll.u32 [#allocation10], 4
      %s73 = int_to_ptr.vmem [resolvable:$true] %s72
      %78 = dma.hbm_to_vmem [thread:$0]  %s71, 3072, %s73, [#allocation9], 64, 64, 4
    $region25: #{tpu_custom_call.1} parent=1 // pred_fallthru
      _
    // Predicated region
    $region26: #{tpu_custom_call.1} parent=1 // pred_check
      _
    $region27: #{tpu_custom_call.1} parent=1 // pred_check_branch
      %80 = sbr.rel (0) target = $region29
    $region28: #{tpu_custom_call.1} parent=1 // pred_region
      _
    $region29: #{tpu_custom_call.1} parent=1 // pred_fallthru
      _
    // Predicated region
    $region30: #{tpu_custom_call.1} parent=1 // pred_check
      _
    $region31: #{tpu_custom_call.1} parent=1 // pred_check_branch
      %82 = sbr.rel (0) target = $region33
    $region32: #{tpu_custom_call.1} parent=1 // pred_region
      %84 = dma.done [#allocation3], 128
    $region33: #{tpu_custom_call.1} parent=1 // pred_fallthru
      _
    // Predicated region
    $region34: #{tpu_custom_call.1} parent=1 // pred_check
      _
    $region35: #{tpu_custom_call.1} parent=1 // pred_check_branch
      %86 = sbr.rel (0) target = $region37
    $region36: #{tpu_custom_call.1} parent=1 // pred_region
      %88 = dma.done [#allocation6], 1024
    $region37: #{tpu_custom_call.1} parent=1 // pred_fallthru
      _
    // Predicated region
    $region38: #{tpu_custom_call.1} parent=1 // pred_check
      _
    $region39: #{tpu_custom_call.1} parent=1 // pred_check_branch
      %90 = sbr.rel (0) target = $region41
    $region40: #{tpu_custom_call.1} parent=1 // pred_region
      %92 = dma.done [#allocation6], 64
    $region41: #{tpu_custom_call.1} parent=1 // pred_fallthru
      _
    // Predicated region
    $region42: #{tpu_custom_call.1} parent=1 // pred_check
      _
    $region43: #{tpu_custom_call.1} parent=1 // pred_check_branch
      %94 = sbr.rel (0) target = $region45
    $region44: #{tpu_custom_call.1} parent=1 // pred_region
      %96 = dma.done [#allocation9], 12288
    $region45: #{tpu_custom_call.1} parent=1 // pred_fallthru
      _
    // Predicated region
    $region46: #{tpu_custom_call.1} parent=1 // pred_check
      _
    $region47: #{tpu_custom_call.1} parent=1 // pred_check_branch
      %98 = sbr.rel (0) target = $region49
    $region48: #{tpu_custom_call.1} parent=1 // pred_region
      %100 = dma.done [#allocation9], 3072
    $region49: #{tpu_custom_call.1} parent=1 // pred_fallthru
      _
    %v102 = vld [vmem:[#allocation2] sm:$0xff]
    %v103 = vpack.c.bf16 %v102, %v102
    %v104 = vld [vmem:[#allocation5] sm:$0xff]
    %v105 = vld [vmem:[#allocation5 + $0x8] sm:$0xff]
    %v106 = vld [vmem:[#allocation5 + $0x10] sm:$0xff]
    %v107 = vld [vmem:[#allocation5 + $0x18] sm:$0xff]
    %v108 = vld [vmem:[#allocation5 + $0x20] sm:$0xff]
    %v109 = vld [vmem:[#allocation5 + $0x28] sm:$0xff]
    %v110 = vld [vmem:[#allocation5 + $0x30] sm:$0xff]
    %v111 = vld [vmem:[#allocation5 + $0x38] sm:$0xff]
    %v112 = vld [vmem:[#allocation7] sm:$0xf]
    %v114 = vperm.slane %v112, 0
    %v115 = vperm.slane %v112, 1
    %v116 = vperm.slane %v112, 2
    %v117 = vperm.slane %v112, 3
    %v130 = vunpack.c.l.b16 %v104
    %v131 = vunpack.c.h.b16 %v104
    %v132 = vunpack.c.l.b16 %v105
    %v133 = vunpack.c.h.b16 %v105
    %v134 = vunpack.c.l.b16 %v106
    %v135 = vunpack.c.h.b16 %v106
    %v136 = vunpack.c.l.b16 %v107
    %v137 = vunpack.c.h.b16 %v107
    %v138 = vunpack.c.l.b16 %v108
    %v139 = vunpack.c.h.b16 %v108
    %v140 = vunpack.c.l.b16 %v109
    %v141 = vunpack.c.h.b16 %v109
    %v142 = vunpack.c.l.b16 %v110
    %v143 = vunpack.c.h.b16 %v110
    %v144 = vunpack.c.l.b16 %v111
    %v145 = vunpack.c.h.b16 %v111
    %v146 = vpack.c.b16 %v134, %v130
    %v147 = vpack.c.b16 %v135, %v131
    %v148 = vpack.c.b16 %v136, %v132
    %v149 = vpack.c.b16 %v137, %v133
    %v150 = vpack.c.b16 %v142, %v138
    %v151 = vpack.c.b16 %v143, %v139
    %v152 = vpack.c.b16 %v144, %v140
    %v153 = vpack.c.b16 %v145, %v141
    %vm162 = vcmask 261120
    %v164 = vsel %vm162, %v103, 0
    %166 = vmatpush.bf16.msra.mxu0 0
    %167 = vmatpush.bf16.msra.mxu0 0
    %168 = vmatpush.bf16.msra.mxu0 0
    %169 = vmatpush.bf16.msra.mxu0 0
    %170 = vmatpush.bf16.msra.mxu0 0
    %171 = vmatpush.bf16.msra.mxu0 0
    %172 = vmatpush.bf16.msra.mxu0 %v150
    %173 = vmatpush.bf16.msra.mxu0 %v146
    %174 = vmatmul.bf16.gmra.mxu0 %v164
    %v175 = vpop.f32.mrf.mxu0
    %v176 = vadd.f32 %v114, %v175
    %v177 = vpop.f32.mrf.mxu0
    %178 = vdwg.mxu0
    %179 = vmatpush.bf16.msra.mxu0 0
    %180 = vmatpush.bf16.msra.mxu0 0
    %181 = vmatpush.bf16.msra.mxu0 0
    %182 = vmatpush.bf16.msra.mxu0 0
    %183 = vmatpush.bf16.msra.mxu0 0
    %184 = vmatpush.bf16.msra.mxu0 0
    %185 = vmatpush.bf16.msra.mxu0 %v151
    %186 = vmatpush.bf16.msra.mxu0 %v147
    %187 = vmatmul.bf16.gmra.mxu0 %v164
    %v188 = vpop.f32.mrf.mxu0
    %v189 = vadd.f32 %v115, %v188
    %v190 = vpop.f32.mrf.mxu0
    %191 = vdwg.mxu0
    %192 = vmatpush.bf16.msra.mxu0 0
    %193 = vmatpush.bf16.msra.mxu0 0
    %194 = vmatpush.bf16.msra.mxu0 0
    %195 = vmatpush.bf16.msra.mxu0 0
    %196 = vmatpush.bf16.msra.mxu0 0
    %197 = vmatpush.bf16.msra.mxu0 0
    %198 = vmatpush.bf16.msra.mxu0 %v152
    %199 = vmatpush.bf16.msra.mxu0 %v148
    %200 = vmatmul.bf16.gmra.mxu0 %v164
    %v201 = vpop.f32.mrf.mxu0
    %v202 = vadd.f32 %v116, %v201
    %v203 = vpop.f32.mrf.mxu0
    %204 = vdwg.mxu0
    %205 = vmatpush.bf16.msra.mxu0 0
    %206 = vmatpush.bf16.msra.mxu0 0
    %207 = vmatpush.bf16.msra.mxu0 0
    %208 = vmatpush.bf16.msra.mxu0 0
    %209 = vmatpush.bf16.msra.mxu0 0
    %210 = vmatpush.bf16.msra.mxu0 0
    %211 = vmatpush.bf16.msra.mxu0 %v153
    %212 = vmatpush.bf16.msra.mxu0 %v149
    %213 = vmatmul.bf16.gmra.mxu0 %v164
    %v214 = vpop.f32.mrf.mxu0
    %v215 = vadd.f32 %v117, %v214
    %v216 = vpop.f32.mrf.mxu0
    %217 = vdwg.mxu0
    %v218 = vpack.c.bf16 %v189, %v176
    %v219 = vpack.c.bf16 %v215, %v202
    %v220 = vunpack.c.l.bf16 %v218
    %v221 = vunpack.c.h.bf16 %v218
    %v222 = vunpack.c.l.bf16 %v219
    %v223 = vunpack.c.h.bf16 %v219
    %v224 = vmax.f32 %v220, 0.0
    %v225 = vmax.f32 %v221, 0.0
    %v226 = vmax.f32 %v222, 0.0
    %v227 = vmax.f32 %v223, 0.0
    %v228 = vpack.c.bf16 %v224, %v224
    %v229 = vpack.c.bf16 %v225, %v225
    %v230 = vpack.c.bf16 %v226, %v226
    %v231 = vpack.c.bf16 %v227, %v227
    %v232 = vld [vmem:[#allocation8] sm:$0xff]
    %v233 = vld [vmem:[#allocation8 + $0x8] sm:$0xf]
    %v234 = vld [vmem:[#allocation8 + $0xc] sm:$0xff]
    %v235 = vld [vmem:[#allocation8 + $0x14] sm:$0xf]
    %v236 = vld [vmem:[#allocation8 + $0x18] sm:$0xff]
    %v237 = vld [vmem:[#allocation8 + $0x20] sm:$0xf]
    %v238 = vld [vmem:[#allocation8 + $0x24] sm:$0xff]
    %v239 = vld [vmem:[#allocation8 + $0x2c] sm:$0xf]
    %v240 = vld [vmem:[#allocation8 + $0x30] sm:$0xff]
    %v241 = vld [vmem:[#allocation8 + $0x38] sm:$0xf]
    %v242 = vld [vmem:[#allocation8 + $0x3c] sm:$0xff]
    %v243 = vld [vmem:[#allocation8 + $0x44] sm:$0xf]
    %v244 = vld [vmem:[#allocation8 + $0x48] sm:$0xff]
    %v245 = vld [vmem:[#allocation8 + $0x50] sm:$0xf]
    %v246 = vld [vmem:[#allocation8 + $0x54] sm:$0xff]
    %v247 = vld [vmem:[#allocation8 + $0x5c] sm:$0xf]
    %v248 = vld [vmem:[#allocation8 + $0x60] sm:$0xff]
    %v249 = vld [vmem:[#allocation8 + $0x68] sm:$0xf]
    %v250 = vld [vmem:[#allocation8 + $0x6c] sm:$0xff]
    %v251 = vld [vmem:[#allocation8 + $0x74] sm:$0xf]
    %v252 = vld [vmem:[#allocation8 + $0x78] sm:$0xff]
    %v253 = vld [vmem:[#allocation8 + $0x80] sm:$0xf]
    %v254 = vld [vmem:[#allocation8 + $0x84] sm:$0xff]
    %v255 = vld [vmem:[#allocation8 + $0x8c] sm:$0xf]
    %v256 = vld [vmem:[#allocation8 + $0x90] sm:$0xff]
    %v257 = vld [vmem:[#allocation8 + $0x98] sm:$0xf]
    %v258 = vld [vmem:[#allocation8 + $0x9c] sm:$0xff]
    %v259 = vld [vmem:[#allocation8 + $0xa4] sm:$0xf]
    %v260 = vld [vmem:[#allocation8 + $0xa8] sm:$0xff]
    %v261 = vld [vmem:[#allocation8 + $0xb0] sm:$0xf]
    %v262 = vld [vmem:[#allocation8 + $0xb4] sm:$0xff]
    %v263 = vld [vmem:[#allocation8 + $0xbc] sm:$0xf]
    %v264 = vld [vmem:[#allocation8 + $0xc0] sm:$0xff]
    %v265 = vld [vmem:[#allocation8 + $0xc8] sm:$0xf]
    %v266 = vld [vmem:[#allocation8 + $0xcc] sm:$0xff]
    %v267 = vld [vmem:[#allocation8 + $0xd4] sm:$0xf]
    %v268 = vld [vmem:[#allocation8 + $0xd8] sm:$0xff]
    %v269 = vld [vmem:[#allocation8 + $0xe0] sm:$0xf]
    %v270 = vld [vmem:[#allocation8 + $0xe4] sm:$0xff]
    %v271 = vld [vmem:[#allocation8 + $0xec] sm:$0xf]
    %v272 = vld [vmem:[#allocation8 + $0xf0] sm:$0xff]
    %v273 = vld [vmem:[#allocation8 + $0xf8] sm:$0xf]
    %v274 = vld [vmem:[#allocation8 + $0xfc] sm:$0xff]
    %v275 = vld [vmem:[#allocation8 + $0x104] sm:$0xf]
    %v276 = vld [vmem:[#allocation8 + $0x108] sm:$0xff]
    %v277 = vld [vmem:[#allocation8 + $0x110] sm:$0xf]
    %v278 = vld [vmem:[#allocation8 + $0x114] sm:$0xff]
    %v279 = vld [vmem:[#allocation8 + $0x11c] sm:$0xf]
    %v280 = vld [vmem:[#allocation8 + $0x120] sm:$0xff]
    %v281 = vld [vmem:[#allocation8 + $0x128] sm:$0xf]
    %v282 = vld [vmem:[#allocation8 + $0x12c] sm:$0xff]
    %v283 = vld [vmem:[#allocation8 + $0x134] sm:$0xf]
    %v284 = vld [vmem:[#allocation8 + $0x138] sm:$0xff]
    %v285 = vld [vmem:[#allocation8 + $0x140] sm:$0xf]
    %v286 = vld [vmem:[#allocation8 + $0x144] sm:$0xff]
    %v287 = vld [vmem:[#allocation8 + $0x14c] sm:$0xf]
    %v288 = vld [vmem:[#allocation8 + $0x150] sm:$0xff]
    %v289 = vld [vmem:[#allocation8 + $0x158] sm:$0xf]
    %v290 = vld [vmem:[#allocation8 + $0x15c] sm:$0xff]
    %v291 = vld [vmem:[#allocation8 + $0x164] sm:$0xf]
    %v292 = vld [vmem:[#allocation8 + $0x168] sm:$0xff]
    %v293 = vld [vmem:[#allocation8 + $0x170] sm:$0xf]
    %v294 = vld [vmem:[#allocation8 + $0x174] sm:$0xff]
    %v295 = vld [vmem:[#allocation8 + $0x17c] sm:$0xf]
    %v296 = vld [vmem:[#allocation8 + $0x180] sm:$0xff]
    %v297 = vld [vmem:[#allocation8 + $0x188] sm:$0xf]
    %v298 = vld [vmem:[#allocation8 + $0x18c] sm:$0xff]
    %v299 = vld [vmem:[#allocation8 + $0x194] sm:$0xf]
    %v300 = vld [vmem:[#allocation8 + $0x198] sm:$0xff]
    %v301 = vld [vmem:[#allocation8 + $0x1a0] sm:$0xf]
    %v302 = vld [vmem:[#allocation8 + $0x1a4] sm:$0xff]
    %v303 = vld [vmem:[#allocation8 + $0x1ac] sm:$0xf]
    %v304 = vld [vmem:[#allocation8 + $0x1b0] sm:$0xff]
    %v305 = vld [vmem:[#allocation8 + $0x1b8] sm:$0xf]
    %v306 = vld [vmem:[#allocation8 + $0x1bc] sm:$0xff]
    %v307 = vld [vmem:[#allocation8 + $0x1c4] sm:$0xf]
    %v308 = vld [vmem:[#allocation8 + $0x1c8] sm:$0xff]
    %v309 = vld [vmem:[#allocation8 + $0x1d0] sm:$0xf]
    %v310 = vld [vmem:[#allocation8 + $0x1d4] sm:$0xff]
    %v311 = vld [vmem:[#allocation8 + $0x1dc] sm:$0xf]
    %v312 = vld [vmem:[#allocation8 + $0x1e0] sm:$0xff]
    %v313 = vld [vmem:[#allocation8 + $0x1e8] sm:$0xf]
    %v314 = vld [vmem:[#allocation8 + $0x1ec] sm:$0xff]
    %v315 = vld [vmem:[#allocation8 + $0x1f4] sm:$0xf]
    %v316 = vld [vmem:[#allocation8 + $0x1f8] sm:$0xff]
    %v317 = vld [vmem:[#allocation8 + $0x200] sm:$0xf]
    %v318 = vld [vmem:[#allocation8 + $0x204] sm:$0xff]
    %v319 = vld [vmem:[#allocation8 + $0x20c] sm:$0xf]
    %v320 = vld [vmem:[#allocation8 + $0x210] sm:$0xff]
    %v321 = vld [vmem:[#allocation8 + $0x218] sm:$0xf]
    %v322 = vld [vmem:[#allocation8 + $0x21c] sm:$0xff]
    %v323 = vld [vmem:[#allocation8 + $0x224] sm:$0xf]
    %v324 = vld [vmem:[#allocation8 + $0x228] sm:$0xff]
    %v325 = vld [vmem:[#allocation8 + $0x230] sm:$0xf]
    %v326 = vld [vmem:[#allocation8 + $0x234] sm:$0xff]
    %v327 = vld [vmem:[#allocation8 + $0x23c] sm:$0xf]
    %v328 = vld [vmem:[#allocation8 + $0x240] sm:$0xff]
    %v329 = vld [vmem:[#allocation8 + $0x248] sm:$0xf]
    %v330 = vld [vmem:[#allocation8 + $0x24c] sm:$0xff]
    %v331 = vld [vmem:[#allocation8 + $0x254] sm:$0xf]
    %v332 = vld [vmem:[#allocation8 + $0x258] sm:$0xff]
    %v333 = vld [vmem:[#allocation8 + $0x260] sm:$0xf]
    %v334 = vld [vmem:[#allocation8 + $0x264] sm:$0xff]
    %v335 = vld [vmem:[#allocation8 + $0x26c] sm:$0xf]
    %v336 = vld [vmem:[#allocation8 + $0x270] sm:$0xff]
    %v337 = vld [vmem:[#allocation8 + $0x278] sm:$0xf]
    %v338 = vld [vmem:[#allocation8 + $0x27c] sm:$0xff]
    %v339 = vld [vmem:[#allocation8 + $0x284] sm:$0xf]
    %v340 = vld [vmem:[#allocation8 + $0x288] sm:$0xff]
    %v341 = vld [vmem:[#allocation8 + $0x290] sm:$0xf]
    %v342 = vld [vmem:[#allocation8 + $0x294] sm:$0xff]
    %v343 = vld [vmem:[#allocation8 + $0x29c] sm:$0xf]
    %v344 = vld [vmem:[#allocation8 + $0x2a0] sm:$0xff]
    %v345 = vld [vmem:[#allocation8 + $0x2a8] sm:$0xf]
    %v346 = vld [vmem:[#allocation8 + $0x2ac] sm:$0xff]
    %v347 = vld [vmem:[#allocation8 + $0x2b4] sm:$0xf]
    %v348 = vld [vmem:[#allocation8 + $0x2b8] sm:$0xff]
    %v349 = vld [vmem:[#allocation8 + $0x2c0] sm:$0xf]
    %v350 = vld [vmem:[#allocation8 + $0x2c4] sm:$0xff]
    %v351 = vld [vmem:[#allocation8 + $0x2cc] sm:$0xf]
    %v352 = vld [vmem:[#allocation8 + $0x2d0] sm:$0xff]
    %v353 = vld [vmem:[#allocation8 + $0x2d8] sm:$0xf]
    %v354 = vld [vmem:[#allocation8 + $0x2dc] sm:$0xff]
    %v355 = vld [vmem:[#allocation8 + $0x2e4] sm:$0xf]
    %v356 = vld [vmem:[#allocation8 + $0x2e8] sm:$0xff]
    %v357 = vld [vmem:[#allocation8 + $0x2f0] sm:$0xf]
    %v358 = vld [vmem:[#allocation8 + $0x2f4] sm:$0xff]
    %v359 = vld [vmem:[#allocation8 + $0x2fc] sm:$0xf]
    %v360 = vld [vmem:[%s4] sm:$0x7]
    %v362 = vperm.slane %v360, 0
    %v363 = vperm.slane %v360, 1
    %v364 = vperm.slane %v360, 2
    %v496 = vunpack.c.l.b16 %v232
    %v497 = vunpack.c.h.b16 %v232
    %v498 = vunpack.c.l.b16 %v233
    %v499 = vunpack.c.l.b16 %v234
    %v500 = vunpack.c.h.b16 %v234
    %v501 = vunpack.c.l.b16 %v235
    %v502 = vunpack.c.l.b16 %v236
    %v503 = vunpack.c.h.b16 %v236
    %v504 = vunpack.c.l.b16 %v237
    %v505 = vunpack.c.l.b16 %v238
    %v506 = vunpack.c.h.b16 %v238
    %v507 = vunpack.c.l.b16 %v239
    %v508 = vunpack.c.l.b16 %v240
    %v509 = vunpack.c.h.b16 %v240
    %v510 = vunpack.c.l.b16 %v241
    %v511 = vunpack.c.l.b16 %v242
    %v512 = vunpack.c.h.b16 %v242
    %v513 = vunpack.c.l.b16 %v243
    %v514 = vunpack.c.l.b16 %v244
    %v515 = vunpack.c.h.b16 %v244
    %v516 = vunpack.c.l.b16 %v245
    %v517 = vunpack.c.l.b16 %v246
    %v518 = vunpack.c.h.b16 %v246
    %v519 = vunpack.c.l.b16 %v247
    %v520 = vunpack.c.l.b16 %v248
    %v521 = vunpack.c.h.b16 %v248
    %v522 = vunpack.c.l.b16 %v249
    %v523 = vunpack.c.l.b16 %v250
    %v524 = vunpack.c.h.b16 %v250
    %v525 = vunpack.c.l.b16 %v251
    %v526 = vunpack.c.l.b16 %v252
    %v527 = vunpack.c.h.b16 %v252
    %v528 = vunpack.c.l.b16 %v253
    %v529 = vunpack.c.l.b16 %v254
    %v530 = vunpack.c.h.b16 %v254
    %v531 = vunpack.c.l.b16 %v255
    %v532 = vunpack.c.l.b16 %v256
    %v533 = vunpack.c.h.b16 %v256
    %v534 = vunpack.c.l.b16 %v257
    %v535 = vunpack.c.l.b16 %v258
    %v536 = vunpack.c.h.b16 %v258
    %v537 = vunpack.c.l.b16 %v259
    %v538 = vunpack.c.l.b16 %v260
    %v539 = vunpack.c.h.b16 %v260
    %v540 = vunpack.c.l.b16 %v261
    %v541 = vunpack.c.l.b16 %v262
    %v542 = vunpack.c.h.b16 %v262
    %v543 = vunpack.c.l.b16 %v263
    %v544 = vunpack.c.l.b16 %v264
    %v545 = vunpack.c.h.b16 %v264
    %v546 = vunpack.c.l.b16 %v265
    %v547 = vunpack.c.l.b16 %v266
    %v548 = vunpack.c.h.b16 %v266
    %v549 = vunpack.c.l.b16 %v267
    %v550 = vunpack.c.l.b16 %v268
    %v551 = vunpack.c.h.b16 %v268
    %v552 = vunpack.c.l.b16 %v269
    %v553 = vunpack.c.l.b16 %v270
    %v554 = vunpack.c.h.b16 %v270
    %v555 = vunpack.c.l.b16 %v271
    %v556 = vunpack.c.l.b16 %v272
    %v557 = vunpack.c.h.b16 %v272
    %v558 = vunpack.c.l.b16 %v273
    %v559 = vunpack.c.l.b16 %v274
    %v560 = vunpack.c.h.b16 %v274
    %v561 = vunpack.c.l.b16 %v275
    %v562 = vunpack.c.l.b16 %v276
    %v563 = vunpack.c.h.b16 %v276
    %v564 = vunpack.c.l.b16 %v277
    %v565 = vunpack.c.l.b16 %v278
    %v566 = vunpack.c.h.b16 %v278
    %v567 = vunpack.c.l.b16 %v279
    %v568 = vunpack.c.l.b16 %v280
    %v569 = vunpack.c.h.b16 %v280
    %v570 = vunpack.c.l.b16 %v281
    %v571 = vunpack.c.l.b16 %v282
    %v572 = vunpack.c.h.b16 %v282
    %v573 = vunpack.c.l.b16 %v283
    %v574 = vunpack.c.l.b16 %v284
    %v575 = vunpack.c.h.b16 %v284
    %v576 = vunpack.c.l.b16 %v285
    %v577 = vunpack.c.l.b16 %v286
    %v578 = vunpack.c.h.b16 %v286
    %v579 = vunpack.c.l.b16 %v287
    %v580 = vunpack.c.l.b16 %v288
    %v581 = vunpack.c.h.b16 %v288
    %v582 = vunpack.c.l.b16 %v289
    %v583 = vunpack.c.l.b16 %v290
    %v584 = vunpack.c.h.b16 %v290
    %v585 = vunpack.c.l.b16 %v291
    %v586 = vunpack.c.l.b16 %v292
    %v587 = vunpack.c.h.b16 %v292
    %v588 = vunpack.c.l.b16 %v293
    %v589 = vunpack.c.l.b16 %v294
    %v590 = vunpack.c.h.b16 %v294
    %v591 = vunpack.c.l.b16 %v295
    %v592 = vunpack.c.l.b16 %v296
    %v593 = vunpack.c.h.b16 %v296
    %v594 = vunpack.c.l.b16 %v297
    %v595 = vunpack.c.l.b16 %v298
    %v596 = vunpack.c.h.b16 %v298
    %v597 = vunpack.c.l.b16 %v299
    %v598 = vunpack.c.l.b16 %v300
    %v599 = vunpack.c.h.b16 %v300
    %v600 = vunpack.c.l.b16 %v301
    %v601 = vunpack.c.l.b16 %v302
    %v602 = vunpack.c.h.b16 %v302
    %v603 = vunpack.c.l.b16 %v303
    %v604 = vunpack.c.l.b16 %v304
    %v605 = vunpack.c.h.b16 %v304
    %v606 = vunpack.c.l.b16 %v305
    %v607 = vunpack.c.l.b16 %v306
    %v608 = vunpack.c.h.b16 %v306
    %v609 = vunpack.c.l.b16 %v307
    %v610 = vunpack.c.l.b16 %v308
    %v611 = vunpack.c.h.b16 %v308
    %v612 = vunpack.c.l.b16 %v309
    %v613 = vunpack.c.l.b16 %v310
    %v614 = vunpack.c.h.b16 %v310
    %v615 = vunpack.c.l.b16 %v311
    %v616 = vunpack.c.l.b16 %v312
    %v617 = vunpack.c.h.b16 %v312
    %v618 = vunpack.c.l.b16 %v313
    %v619 = vunpack.c.l.b16 %v314
    %v620 = vunpack.c.h.b16 %v314
    %v621 = vunpack.c.l.b16 %v315
    %v622 = vunpack.c.l.b16 %v316
    %v623 = vunpack.c.h.b16 %v316
    %v624 = vunpack.c.l.b16 %v317
    %v625 = vunpack.c.l.b16 %v318
    %v626 = vunpack.c.h.b16 %v318
    %v627 = vunpack.c.l.b16 %v319
    %v628 = vunpack.c.l.b16 %v320
    %v629 = vunpack.c.h.b16 %v320
    %v630 = vunpack.c.l.b16 %v321
    %v631 = vunpack.c.l.b16 %v322
    %v632 = vunpack.c.h.b16 %v322
    %v633 = vunpack.c.l.b16 %v323
    %v634 = vunpack.c.l.b16 %v324
    %v635 = vunpack.c.h.b16 %v324
    %v636 = vunpack.c.l.b16 %v325
    %v637 = vunpack.c.l.b16 %v326
    %v638 = vunpack.c.h.b16 %v326
    %v639 = vunpack.c.l.b16 %v327
    %v640 = vunpack.c.l.b16 %v328
    %v641 = vunpack.c.h.b16 %v328
    %v642 = vunpack.c.l.b16 %v329
    %v643 = vunpack.c.l.b16 %v330
    %v644 = vunpack.c.h.b16 %v330
    %v645 = vunpack.c.l.b16 %v331
    %v646 = vunpack.c.l.b16 %v332
    %v647 = vunpack.c.h.b16 %v332
    %v648 = vunpack.c.l.b16 %v333
    %v649 = vunpack.c.l.b16 %v334
    %v650 = vunpack.c.h.b16 %v334
    %v651 = vunpack.c.l.b16 %v335
    %v652 = vunpack.c.l.b16 %v336
    %v653 = vunpack.c.h.b16 %v336
    %v654 = vunpack.c.l.b16 %v337
    %v655 = vunpack.c.l.b16 %v338
    %v656 = vunpack.c.h.b16 %v338
    %v657 = vunpack.c.l.b16 %v339
    %v658 = vunpack.c.l.b16 %v340
    %v659 = vunpack.c.h.b16 %v340
    %v660 = vunpack.c.l.b16 %v341
    %v661 = vunpack.c.l.b16 %v342
    %v662 = vunpack.c.h.b16 %v342
    %v663 = vunpack.c.l.b16 %v343
    %v664 = vunpack.c.l.b16 %v344
    %v665 = vunpack.c.h.b16 %v344
    %v666 = vunpack.c.l.b16 %v345
    %v667 = vunpack.c.l.b16 %v346
    %v668 = vunpack.c.h.b16 %v346
    %v669 = vunpack.c.l.b16 %v347
    %v670 = vunpack.c.l.b16 %v348
    %v671 = vunpack.c.h.b16 %v348
    %v672 = vunpack.c.l.b16 %v349
    %v673 = vunpack.c.l.b16 %v350
    %v674 = vunpack.c.h.b16 %v350
    %v675 = vunpack.c.l.b16 %v351
    %v676 = vunpack.c.l.b16 %v352
    %v677 = vunpack.c.h.b16 %v352
    %v678 = vunpack.c.l.b16 %v353
    %v679 = vunpack.c.l.b16 %v354
    %v680 = vunpack.c.h.b16 %v354
    %v681 = vunpack.c.l.b16 %v355
    %v682 = vunpack.c.l.b16 %v356
    %v683 = vunpack.c.h.b16 %v356
    %v684 = vunpack.c.l.b16 %v357
    %v685 = vunpack.c.l.b16 %v358
    %v686 = vunpack.c.h.b16 %v358
    %v687 = vunpack.c.l.b16 %v359
    %v688 = vpack.c.b16 %v499, %v496
    %v689 = vpack.c.b16 %v500, %v497
    %v690 = vpack.c.b16 %v501, %v498
    %v691 = vpack.c.b16 %v505, %v502
    %v692 = vpack.c.b16 %v506, %v503
    %v693 = vpack.c.b16 %v507, %v504
    %v694 = vpack.c.b16 %v511, %v508
    %v695 = vpack.c.b16 %v512, %v509
    %v696 = vpack.c.b16 %v513, %v510
    %v697 = vpack.c.b16 %v517, %v514
    %v698 = vpack.c.b16 %v518, %v515
    %v699 = vpack.c.b16 %v519, %v516
    %v700 = vpack.c.b16 %v523, %v520
    %v701 = vpack.c.b16 %v524, %v521
    %v702 = vpack.c.b16 %v525, %v522
    %v703 = vpack.c.b16 %v529, %v526
    %v704 = vpack.c.b16 %v530, %v527
    %v705 = vpack.c.b16 %v531, %v528
    %v706 = vpack.c.b16 %v535, %v532
    %v707 = vpack.c.b16 %v536, %v533
    %v708 = vpack.c.b16 %v537, %v534
    %v709 = vpack.c.b16 %v541, %v538
    %v710 = vpack.c.b16 %v542, %v539
    %v711 = vpack.c.b16 %v543, %v540
    %v712 = vpack.c.b16 %v547, %v544
    %v713 = vpack.c.b16 %v548, %v545
    %v714 = vpack.c.b16 %v549, %v546
    %v715 = vpack.c.b16 %v553, %v550
    %v716 = vpack.c.b16 %v554, %v551
    %v717 = vpack.c.b16 %v555, %v552
    %v718 = vpack.c.b16 %v559, %v556
    %v719 = vpack.c.b16 %v560, %v557
    %v720 = vpack.c.b16 %v561, %v558
    %v721 = vpack.c.b16 %v565, %v562
    %v722 = vpack.c.b16 %v566, %v563
    %v723 = vpack.c.b16 %v567, %v564
    %v724 = vpack.c.b16 %v571, %v568
    %v725 = vpack.c.b16 %v572, %v569
    %v726 = vpack.c.b16 %v573, %v570
    %v727 = vpack.c.b16 %v577, %v574
    %v728 = vpack.c.b16 %v578, %v575
    %v729 = vpack.c.b16 %v579, %v576
    %v730 = vpack.c.b16 %v583, %v580
    %v731 = vpack.c.b16 %v584, %v581
    %v732 = vpack.c.b16 %v585, %v582
    %v733 = vpack.c.b16 %v589, %v586
    %v734 = vpack.c.b16 %v590, %v587
    %v735 = vpack.c.b16 %v591, %v588
    %v736 = vpack.c.b16 %v595, %v592
    %v737 = vpack.c.b16 %v596, %v593
    %v738 = vpack.c.b16 %v597, %v594
    %v739 = vpack.c.b16 %v601, %v598
    %v740 = vpack.c.b16 %v602, %v599
    %v741 = vpack.c.b16 %v603, %v600
    %v742 = vpack.c.b16 %v607, %v604
    %v743 = vpack.c.b16 %v608, %v605
    %v744 = vpack.c.b16 %v609, %v606
    %v745 = vpack.c.b16 %v613, %v610
    %v746 = vpack.c.b16 %v614, %v611
    %v747 = vpack.c.b16 %v615, %v612
    %v748 = vpack.c.b16 %v619, %v616
    %v749 = vpack.c.b16 %v620, %v617
    %v750 = vpack.c.b16 %v621, %v618
    %v751 = vpack.c.b16 %v625, %v622
    %v752 = vpack.c.b16 %v626, %v623
    %v753 = vpack.c.b16 %v627, %v624
    %v754 = vpack.c.b16 %v631, %v628
    %v755 = vpack.c.b16 %v632, %v629
    %v756 = vpack.c.b16 %v633, %v630
    %v757 = vpack.c.b16 %v637, %v634
    %v758 = vpack.c.b16 %v638, %v635
    %v759 = vpack.c.b16 %v639, %v636
    %v760 = vpack.c.b16 %v643, %v640
    %v761 = vpack.c.b16 %v644, %v641
    %v762 = vpack.c.b16 %v645, %v642
    %v763 = vpack.c.b16 %v649, %v646
    %v764 = vpack.c.b16 %v650, %v647
    %v765 = vpack.c.b16 %v651, %v648
    %v766 = vpack.c.b16 %v655, %v652
    %v767 = vpack.c.b16 %v656, %v653
    %v768 = vpack.c.b16 %v657, %v654
    %v769 = vpack.c.b16 %v661, %v658
    %v770 = vpack.c.b16 %v662, %v659
    %v771 = vpack.c.b16 %v663, %v660
    %v772 = vpack.c.b16 %v667, %v664
    %v773 = vpack.c.b16 %v668, %v665
    %v774 = vpack.c.b16 %v669, %v666
    %v775 = vpack.c.b16 %v673, %v670
    %v776 = vpack.c.b16 %v674, %v671
    %v777 = vpack.c.b16 %v675, %v672
    %v778 = vpack.c.b16 %v679, %v676
    %v779 = vpack.c.b16 %v680, %v677
    %v780 = vpack.c.b16 %v681, %v678
    %v781 = vpack.c.b16 %v685, %v682
    %v782 = vpack.c.b16 %v686, %v683
    %v783 = vpack.c.b16 %v687, %v684
    %880 = vmatpush.bf16.msra.mxu0 %v709
    %881 = vmatpush.bf16.msra.mxu0 %v706
    %882 = vmatpush.bf16.msra.mxu0 %v703
    %883 = vmatpush.bf16.msra.mxu0 %v700
    %884 = vmatpush.bf16.msra.mxu0 %v697
    %885 = vmatpush.bf16.msra.mxu0 %v694
    %886 = vmatpush.bf16.msra.mxu0 %v691
    %887 = vmatpush.bf16.msra.mxu0 %v688
    %888 = vmatmul.bf16.gmra.mxu0 %v228
    %v889 = vpop.f32.mrf.mxu0
    %v890 = vadd.f32 %v362, %v889
    %v891 = vpop.f32.mrf.mxu0
    %892 = vdwg.mxu0
    %893 = vmatpush.bf16.msra.mxu0 %v733
    %894 = vmatpush.bf16.msra.mxu0 %v730
    %895 = vmatpush.bf16.msra.mxu0 %v727
    %896 = vmatpush.bf16.msra.mxu0 %v724
    %897 = vmatpush.bf16.msra.mxu0 %v721
    %898 = vmatpush.bf16.msra.mxu0 %v718
    %899 = vmatpush.bf16.msra.mxu0 %v715
    %900 = vmatpush.bf16.msra.mxu0 %v712
    %901 = vmatmul.bf16.gmra.mxu0 %v229
    %v902 = vpop.f32.mrf.mxu0
    %v903 = vadd.f32 %v890, %v902
    %v904 = vpop.f32.mrf.mxu0
    %905 = vdwg.mxu0
    %906 = vmatpush.bf16.msra.mxu0 %v757
    %907 = vmatpush.bf16.msra.mxu0 %v754
    %908 = vmatpush.bf16.msra.mxu0 %v751
    %909 = vmatpush.bf16.msra.mxu0 %v748
    %910 = vmatpush.bf16.msra.mxu0 %v745
    %911 = vmatpush.bf16.msra.mxu0 %v742
    %912 = vmatpush.bf16.msra.mxu0 %v739
    %913 = vmatpush.bf16.msra.mxu0 %v736
    %914 = vmatmul.bf16.gmra.mxu0 %v230
    %v915 = vpop.f32.mrf.mxu0
    %v916 = vadd.f32 %v903, %v915
    %v917 = vpop.f32.mrf.mxu0
    %918 = vdwg.mxu0
    %919 = vmatpush.bf16.msra.mxu0 %v781
    %920 = vmatpush.bf16.msra.mxu0 %v778
    %921 = vmatpush.bf16.msra.mxu0 %v775
    %922 = vmatpush.bf16.msra.mxu0 %v772
    %923 = vmatpush.bf16.msra.mxu0 %v769
    %924 = vmatpush.bf16.msra.mxu0 %v766
    %925 = vmatpush.bf16.msra.mxu0 %v763
    %926 = vmatpush.bf16.msra.mxu0 %v760
    %927 = vmatmul.bf16.gmra.mxu0 %v231
    %v928 = vpop.f32.mrf.mxu0
    %v929 = vadd.f32 %v916, %v928
    %v930 = vpop.f32.mrf.mxu0
    %931 = vdwg.mxu0
    %932 = vmatpush.bf16.msra.mxu0 %v710
    %933 = vmatpush.bf16.msra.mxu0 %v707
    %934 = vmatpush.bf16.msra.mxu0 %v704
    %935 = vmatpush.bf16.msra.mxu0 %v701
    %936 = vmatpush.bf16.msra.mxu0 %v698
    %937 = vmatpush.bf16.msra.mxu0 %v695
    %938 = vmatpush.bf16.msra.mxu0 %v692
    %939 = vmatpush.bf16.msra.mxu0 %v689
    %940 = vmatmul.bf16.gmra.mxu0 %v228
    %v941 = vpop.f32.mrf.mxu0
    %v942 = vadd.f32 %v363, %v941
    %v943 = vpop.f32.mrf.mxu0
    %944 = vdwg.mxu0
    %945 = vmatpush.bf16.msra.mxu0 %v734
    %946 = vmatpush.bf16.msra.mxu0 %v731
    %947 = vmatpush.bf16.msra.mxu0 %v728
    %948 = vmatpush.bf16.msra.mxu0 %v725
    %949 = vmatpush.bf16.msra.mxu0 %v722
    %950 = vmatpush.bf16.msra.mxu0 %v719
    %951 = vmatpush.bf16.msra.mxu0 %v716
    %952 = vmatpush.bf16.msra.mxu0 %v713
    %953 = vmatmul.bf16.gmra.mxu0 %v229
    %v954 = vpop.f32.mrf.mxu0
    %v955 = vadd.f32 %v942, %v954
    %v956 = vpop.f32.mrf.mxu0
    %957 = vdwg.mxu0
    %958 = vmatpush.bf16.msra.mxu0 %v758
    %959 = vmatpush.bf16.msra.mxu0 %v755
    %960 = vmatpush.bf16.msra.mxu0 %v752
    %961 = vmatpush.bf16.msra.mxu0 %v749
    %962 = vmatpush.bf16.msra.mxu0 %v746
    %963 = vmatpush.bf16.msra.mxu0 %v743
    %964 = vmatpush.bf16.msra.mxu0 %v740
    %965 = vmatpush.bf16.msra.mxu0 %v737
    %966 = vmatmul.bf16.gmra.mxu0 %v230
    %v967 = vpop.f32.mrf.mxu0
    %v968 = vadd.f32 %v955, %v967
    %v969 = vpop.f32.mrf.mxu0
    %970 = vdwg.mxu0
    %971 = vmatpush.bf16.msra.mxu0 %v782
    %972 = vmatpush.bf16.msra.mxu0 %v779
    %973 = vmatpush.bf16.msra.mxu0 %v776
    %974 = vmatpush.bf16.msra.mxu0 %v773
    %975 = vmatpush.bf16.msra.mxu0 %v770
    %976 = vmatpush.bf16.msra.mxu0 %v767
    %977 = vmatpush.bf16.msra.mxu0 %v764
    %978 = vmatpush.bf16.msra.mxu0 %v761
    %979 = vmatmul.bf16.gmra.mxu0 %v231
    %v980 = vpop.f32.mrf.mxu0
    %v981 = vadd.f32 %v968, %v980
    %v982 = vpop.f32.mrf.mxu0
    %983 = vdwg.mxu0
    %984 = vmatpush.bf16.msra.mxu0 %v711
    %985 = vmatpush.bf16.msra.mxu0 %v708
    %986 = vmatpush.bf16.msra.mxu0 %v705
    %987 = vmatpush.bf16.msra.mxu0 %v702
    %988 = vmatpush.bf16.msra.mxu0 %v699
    %989 = vmatpush.bf16.msra.mxu0 %v696
    %990 = vmatpush.bf16.msra.mxu0 %v693
    %991 = vmatpush.bf16.msra.mxu0 %v690
    %992 = vmatmul.bf16.gmra.mxu0 %v228
    %v993 = vpop.f32.mrf.mxu0
    %v994 = vadd.f32 %v364, %v993
    %v995 = vpop.f32.mrf.mxu0
    %996 = vdwg.mxu0
    %997 = vmatpush.bf16.msra.mxu0 %v735
    %998 = vmatpush.bf16.msra.mxu0 %v732
    %999 = vmatpush.bf16.msra.mxu0 %v729
    %1000 = vmatpush.bf16.msra.mxu0 %v726
    %1001 = vmatpush.bf16.msra.mxu0 %v723
    %1002 = vmatpush.bf16.msra.mxu0 %v720
    %1003 = vmatpush.bf16.msra.mxu0 %v717
    %1004 = vmatpush.bf16.msra.mxu0 %v714
    %1005 = vmatmul.bf16.gmra.mxu0 %v229
    %v1006 = vpop.f32.mrf.mxu0
    %v1007 = vadd.f32 %v994, %v1006
    %v1008 = vpop.f32.mrf.mxu0
    %1009 = vdwg.mxu0
    %1010 = vmatpush.bf16.msra.mxu0 %v759
    %1011 = vmatpush.bf16.msra.mxu0 %v756
    %1012 = vmatpush.bf16.msra.mxu0 %v753
    %1013 = vmatpush.bf16.msra.mxu0 %v750
    %1014 = vmatpush.bf16.msra.mxu0 %v747
    %1015 = vmatpush.bf16.msra.mxu0 %v744
    %1016 = vmatpush.bf16.msra.mxu0 %v741
    %1017 = vmatpush.bf16.msra.mxu0 %v738
    %1018 = vmatmul.bf16.gmra.mxu0 %v230
    %v1019 = vpop.f32.mrf.mxu0
    %v1020 = vadd.f32 %v1007, %v1019
    %v1021 = vpop.f32.mrf.mxu0
    %1022 = vdwg.mxu0
    %1023 = vmatpush.bf16.msra.mxu0 %v783
    %1024 = vmatpush.bf16.msra.mxu0 %v780
    %1025 = vmatpush.bf16.msra.mxu0 %v777
    %1026 = vmatpush.bf16.msra.mxu0 %v774
    %1027 = vmatpush.bf16.msra.mxu0 %v771
    %1028 = vmatpush.bf16.msra.mxu0 %v768
    %1029 = vmatpush.bf16.msra.mxu0 %v765
    %1030 = vmatpush.bf16.msra.mxu0 %v762
    %1031 = vmatmul.bf16.gmra.mxu0 %v231
    %v1032 = vpop.f32.mrf.mxu0
    %v1033 = vadd.f32 %v1020, %v1032
    %v1034 = vpop.f32.mrf.mxu0
    %1035 = vdwg.mxu0
    %v1036 = vpack.c.bf16 %v981, %v929
    %v1037 = vpack.c.bf16 %v1033, %v1033
    %v1038 = vunpack.c.l.bf16 %v1036
    %v1039 = vunpack.c.h.bf16 %v1036
    %v1040 = vunpack.c.l.bf16 %v1037
    %v1041 = vmax.f32 %v1038, 0.0
    %v1042 = vmax.f32 %v1039, 0.0
    %v1043 = vmax.f32 %v1040, 0.0
    %v1044 = vpack.c.bf16 %v1041, %v1041
    %v1045 = vpack.c.bf16 %v1042, %v1042
    %v1046 = vpack.c.bf16 %v1043, %v1043
    %v1047 = vld [vmem:[#allocation10] sm:$0xf]
    %v1048 = vld [vmem:[#allocation10 + $0x4] sm:$0xf]
    %v1049 = vld [vmem:[#allocation10 + $0x8] sm:$0xf]
    %v1050 = vld [vmem:[#allocation10 + $0xc] sm:$0xf]
    %v1051 = vld [vmem:[#allocation10 + $0x10] sm:$0xf]
    %v1052 = vld [vmem:[#allocation10 + $0x14] sm:$0xf]
    %v1053 = vld [vmem:[#allocation10 + $0x18] sm:$0xf]
    %v1054 = vld [vmem:[#allocation10 + $0x1c] sm:$0xf]
    %v1055 = vld [vmem:[#allocation10 + $0x20] sm:$0xf]
    %v1056 = vld [vmem:[#allocation10 + $0x24] sm:$0xf]
    %v1057 = vld [vmem:[#allocation10 + $0x28] sm:$0xf]
    %v1058 = vld [vmem:[#allocation10 + $0x2c] sm:$0xf]
    %v1059 = vld [vmem:[#allocation10 + $0x30] sm:$0xf]
    %v1060 = vld [vmem:[#allocation10 + $0x34] sm:$0xf]
    %v1061 = vld [vmem:[#allocation10 + $0x38] sm:$0xf]
    %v1062 = vld [vmem:[#allocation10 + $0x3c] sm:$0xf]
    %v1063 = vld [vmem:[#allocation10 + $0x40] sm:$0xf]
    %v1064 = vld [vmem:[#allocation10 + $0x44] sm:$0xf]
    %v1065 = vld [vmem:[#allocation10 + $0x48] sm:$0xf]
    %v1066 = vld [vmem:[#allocation10 + $0x4c] sm:$0xf]
    %v1067 = vld [vmem:[#allocation10 + $0x50] sm:$0xf]
    %v1068 = vld [vmem:[#allocation10 + $0x54] sm:$0xf]
    %v1069 = vld [vmem:[#allocation10 + $0x58] sm:$0xf]
    %v1070 = vld [vmem:[#allocation10 + $0x5c] sm:$0xf]
    %v1071 = vld [vmem:[#allocation10 + $0x60] sm:$0xf]
    %v1072 = vld [vmem:[#allocation10 + $0x64] sm:$0xf]
    %v1073 = vld [vmem:[#allocation10 + $0x68] sm:$0xf]
    %v1074 = vld [vmem:[#allocation10 + $0x6c] sm:$0xf]
    %v1075 = vld [vmem:[#allocation10 + $0x70] sm:$0xf]
    %v1076 = vld [vmem:[#allocation10 + $0x74] sm:$0xf]
    %v1077 = vld [vmem:[#allocation10 + $0x78] sm:$0xf]
    %v1078 = vld [vmem:[#allocation10 + $0x7c] sm:$0xf]
    %v1079 = vld [vmem:[#allocation10 + $0x80] sm:$0xf]
    %v1080 = vld [vmem:[#allocation10 + $0x84] sm:$0xf]
    %v1081 = vld [vmem:[#allocation10 + $0x88] sm:$0xf]
    %v1082 = vld [vmem:[#allocation10 + $0x8c] sm:$0xf]
    %v1083 = vld [vmem:[#allocation10 + $0x90] sm:$0xf]
    %v1084 = vld [vmem:[#allocation10 + $0x94] sm:$0xf]
    %v1085 = vld [vmem:[#allocation10 + $0x98] sm:$0xf]
    %v1086 = vld [vmem:[#allocation10 + $0x9c] sm:$0xf]
    %v1087 = vld [vmem:[#allocation10 + $0xa0] sm:$0xf]
    %v1088 = vld [vmem:[#allocation10 + $0xa4] sm:$0xf]
    %v1089 = vld [vmem:[#allocation10 + $0xa8] sm:$0xf]
    %v1090 = vld [vmem:[#allocation10 + $0xac] sm:$0xf]
    %v1091 = vld [vmem:[#allocation10 + $0xb0] sm:$0xf]
    %v1092 = vld [vmem:[#allocation10 + $0xb4] sm:$0xf]
    %v1093 = vld [vmem:[#allocation10 + $0xb8] sm:$0xf]
    %v1094 = vld [vmem:[#allocation10 + $0xbc] sm:$0xf]
    %v1095 = vld [vmem:[%s6] sm:$0x1]
    %v1097 = vperm.slane %v1095, 0
    %v1147 = vunpack.c.l.b16 %v1047
    %v1148 = vunpack.c.l.b16 %v1048
    %v1149 = vunpack.c.l.b16 %v1049
    %v1150 = vunpack.c.l.b16 %v1050
    %v1151 = vunpack.c.l.b16 %v1051
    %v1152 = vunpack.c.l.b16 %v1052
    %v1153 = vunpack.c.l.b16 %v1053
    %v1154 = vunpack.c.l.b16 %v1054
    %v1155 = vunpack.c.l.b16 %v1055
    %v1156 = vunpack.c.l.b16 %v1056
    %v1157 = vunpack.c.l.b16 %v1057
    %v1158 = vunpack.c.l.b16 %v1058
    %v1159 = vunpack.c.l.b16 %v1059
    %v1160 = vunpack.c.l.b16 %v1060
    %v1161 = vunpack.c.l.b16 %v1061
    %v1162 = vunpack.c.l.b16 %v1062
    %v1163 = vunpack.c.l.b16 %v1063
    %v1164 = vunpack.c.l.b16 %v1064
    %v1165 = vunpack.c.l.b16 %v1065
    %v1166 = vunpack.c.l.b16 %v1066
    %v1167 = vunpack.c.l.b16 %v1067
    %v1168 = vunpack.c.l.b16 %v1068
    %v1169 = vunpack.c.l.b16 %v1069
    %v1170 = vunpack.c.l.b16 %v1070
    %v1171 = vunpack.c.l.b16 %v1071
    %v1172 = vunpack.c.l.b16 %v1072
    %v1173 = vunpack.c.l.b16 %v1073
    %v1174 = vunpack.c.l.b16 %v1074
    %v1175 = vunpack.c.l.b16 %v1075
    %v1176 = vunpack.c.l.b16 %v1076
    %v1177 = vunpack.c.l.b16 %v1077
    %v1178 = vunpack.c.l.b16 %v1078
    %v1179 = vunpack.c.l.b16 %v1079
    %v1180 = vunpack.c.l.b16 %v1080
    %v1181 = vunpack.c.l.b16 %v1081
    %v1182 = vunpack.c.l.b16 %v1082
    %v1183 = vunpack.c.l.b16 %v1083
    %v1184 = vunpack.c.l.b16 %v1084
    %v1185 = vunpack.c.l.b16 %v1085
    %v1186 = vunpack.c.l.b16 %v1086
    %v1187 = vunpack.c.l.b16 %v1087
    %v1188 = vunpack.c.l.b16 %v1088
    %v1189 = vunpack.c.l.b16 %v1089
    %v1190 = vunpack.c.l.b16 %v1090
    %v1191 = vunpack.c.l.b16 %v1091
    %v1192 = vunpack.c.l.b16 %v1092
    %v1193 = vunpack.c.l.b16 %v1093
    %v1194 = vunpack.c.l.b16 %v1094
    %v1195 = vpack.c.b16 %v1148, %v1147
    %v1196 = vpack.c.b16 %v1150, %v1149
    %v1197 = vpack.c.b16 %v1152, %v1151
    %v1198 = vpack.c.b16 %v1154, %v1153
    %v1199 = vpack.c.b16 %v1156, %v1155
    %v1200 = vpack.c.b16 %v1158, %v1157
    %v1201 = vpack.c.b16 %v1160, %v1159
    %v1202 = vpack.c.b16 %v1162, %v1161
    %v1203 = vpack.c.b16 %v1164, %v1163
    %v1204 = vpack.c.b16 %v1166, %v1165
    %v1205 = vpack.c.b16 %v1168, %v1167
    %v1206 = vpack.c.b16 %v1170, %v1169
    %v1207 = vpack.c.b16 %v1172, %v1171
    %v1208 = vpack.c.b16 %v1174, %v1173
    %v1209 = vpack.c.b16 %v1176, %v1175
    %v1210 = vpack.c.b16 %v1178, %v1177
    %v1211 = vpack.c.b16 %v1180, %v1179
    %v1212 = vpack.c.b16 %v1182, %v1181
    %v1213 = vpack.c.b16 %v1184, %v1183
    %v1214 = vpack.c.b16 %v1186, %v1185
    %v1215 = vpack.c.b16 %v1188, %v1187
    %v1216 = vpack.c.b16 %v1190, %v1189
    %v1217 = vpack.c.b16 %v1192, %v1191
    %v1218 = vpack.c.b16 %v1194, %v1193
    %1243 = vmatpush.bf16.msra.mxu0 %v1202
    %1244 = vmatpush.bf16.msra.mxu0 %v1201
    %1245 = vmatpush.bf16.msra.mxu0 %v1200
    %1246 = vmatpush.bf16.msra.mxu0 %v1199
    %1247 = vmatpush.bf16.msra.mxu0 %v1198
    %1248 = vmatpush.bf16.msra.mxu0 %v1197
    %1249 = vmatpush.bf16.msra.mxu0 %v1196
    %1250 = vmatpush.bf16.msra.mxu0 %v1195
    %1251 = vmatmul.bf16.gmra.mxu0 %v1044
    %v1252 = vpop.f32.mrf.mxu0
    %v1253 = vadd.f32 %v1097, %v1252
    %v1254 = vpop.f32.mrf.mxu0
    %1255 = vdwg.mxu0
    %1256 = vmatpush.bf16.msra.mxu0 %v1210
    %1257 = vmatpush.bf16.msra.mxu0 %v1209
    %1258 = vmatpush.bf16.msra.mxu0 %v1208
    %1259 = vmatpush.bf16.msra.mxu0 %v1207
    %1260 = vmatpush.bf16.msra.mxu0 %v1206
    %1261 = vmatpush.bf16.msra.mxu0 %v1205
    %1262 = vmatpush.bf16.msra.mxu0 %v1204
    %1263 = vmatpush.bf16.msra.mxu0 %v1203
    %1264 = vmatmul.bf16.gmra.mxu0 %v1045
    %v1265 = vpop.f32.mrf.mxu0
    %v1266 = vadd.f32 %v1253, %v1265
    %v1267 = vpop.f32.mrf.mxu0
    %1268 = vdwg.mxu0
    %1269 = vmatpush.bf16.msra.mxu0 %v1218
    %1270 = vmatpush.bf16.msra.mxu0 %v1217
    %1271 = vmatpush.bf16.msra.mxu0 %v1216
    %1272 = vmatpush.bf16.msra.mxu0 %v1215
    %1273 = vmatpush.bf16.msra.mxu0 %v1214
    %1274 = vmatpush.bf16.msra.mxu0 %v1213
    %1275 = vmatpush.bf16.msra.mxu0 %v1212
    %1276 = vmatpush.bf16.msra.mxu0 %v1211
    %1277 = vmatmul.bf16.gmra.mxu0 %v1046
    %v1278 = vpop.f32.mrf.mxu0
    %v1279 = vadd.f32 %v1266, %v1278
    %v1280 = vpop.f32.mrf.mxu0
    %1281 = vdwg.mxu0
    %v1282 = vtanh.pop %v1279
    %1283 = vst [vmem:[#allocation11] sm:$0xff] %v1282
    // Predicated region
    $region50: #{tpu_custom_call.1} parent=1 // pred_check
      _
    $region51: #{tpu_custom_call.1} parent=1 // pred_check_branch
      %1285 = sbr.rel (0) target = $region53
    $region52: #{tpu_custom_call.1} parent=1 // pred_region
      %1287 = vsyncadd [#allocation4], 0
      %s1289 = sshll.u32 [#allocation11], 4
      %s1290 = int_to_ptr.vmem [resolvable:$true] %s1289
      %s1291 = sshll.u32 %s7, 4
      %s1292 = int_to_ptr.hbm [resolvable:$true] %s1291
      %1294 = dma.vmem_to_hbm [thread:$0]  %s1290, 128, %s1292, [#allocation4]
    $region53: #{tpu_custom_call.1} parent=1 // pred_fallthru
      _
    // Predicated region
    $region54: #{tpu_custom_call.1} parent=1 // pred_check
      _
    $region55: #{tpu_custom_call.1} parent=1 // pred_check_branch
      %1296 = sbr.rel (0) target = $region57
    $region56: #{tpu_custom_call.1} parent=1 // pred_region
      %1298 = dma.done [#allocation4], 128
    $region57: #{tpu_custom_call.1} parent=1 // pred_fallthru
      _
    %1299 = vsyncpa [#allocation3], 1
    %1300 = vsyncpa [#allocation6], 1
    %1301 = vsyncpa [#allocation9], 1
    %1302 = vsyncpa [#allocation4], 1

</llo_original>
